<compile_context>
chip_gen: v6e
topology: v6e:2x2x1
jax: 0.10.0
libtpu: 0.0.40
codegen_flags: <defaults>
</compile_context>

<pallas_src>
import math

import jax
import jax.numpy as jnp
from jax.experimental import pallas as pl
from jax.experimental.pallas import tpu as pltpu


def _round_up(x, m):
    return ((x + m - 1) // m) * m


def gaussian_taps_1d(kernel_size, sigma):
    """Per-axis normalized 1-D Gaussian taps (gh, gw) for dim=2.

    The PyTorch module's 2-D kernel is the product of per-axis Gaussians
    normalized by the total sum, which equals outer(gh, gw) with gh, gw each
    normalized to sum to 1."""
    if isinstance(kernel_size, (int, float)):
        kernel_size = [int(kernel_size)] * 2
    if isinstance(sigma, (int, float)):
        sigma = [float(sigma)] * 2
    taps = []
    for size, std in zip(kernel_size, sigma):
        grid = jnp.arange(size, dtype=jnp.float32)
        mean = (size - 1) / 2.0
        g = (1.0 / (std * math.sqrt(2.0 * math.pi))
             ) * jnp.exp(-(((grid - mean) / std) ** 2) / 2.0)
        taps.append((g / jnp.sum(g)).astype(jnp.float32))
    return taps[0], taps[1]  # (gh, gw)


def gaussian_weight_2d(channels, kernel_size, sigma):
    """(C, 1, kh, kw) depthwise Gaussian weight exactly like the PyTorch module
    (product of per-axis Gaussians, normalized, repeated over channels).
    Used only for the XLA reference check."""
    if isinstance(kernel_size, (int, float)):
        kernel_size = [int(kernel_size)] * 2
    if isinstance(sigma, (int, float)):
        sigma = [float(sigma)] * 2
    grids = jnp.meshgrid(
        *[jnp.arange(s, dtype=jnp.float32) for s in kernel_size], indexing="ij")
    kernel = jnp.ones((), jnp.float32)
    for size, std, mgrid in zip(kernel_size, sigma, grids):
        mean = (size - 1) / 2.0
        kernel = kernel * (1.0 / (std * math.sqrt(2.0 * math.pi))
                           ) * jnp.exp(-(((mgrid - mean) / std) ** 2) / 2.0)
    kernel = kernel / jnp.sum(kernel)
    weight = jnp.broadcast_to(kernel[None, None],
                              (channels, 1, kernel_size[0], kernel_size[1]))
    return weight.astype(jnp.float32)


def _planes_per_step(num_planes, elems_per_plane, itemsize=4):
    """How many (H, W) planes one grid step processes.

    Keeps the (input + output) block — double-buffered by the pipeline — well
    under the smallest default scoped-VMEM limit (16 MiB on v5e), and prefers
    at least two grid steps so v7x's two TensorCores can split the 'parallel'
    plane axis."""
    budget_bytes = 4 * 1024 * 1024
    max_tp = max(1, budget_bytes // max(1, elems_per_plane * itemsize))
    want = min(max_tp, max(1, (num_planes + 1) // 2))
    for cand in range(min(want, num_planes), 0, -1):
        if num_planes % cand == 0:
            return cand
    return 1


def gaussian_smoothing_2d(x, gh, gw):
    """Depthwise Gaussian blur == F.conv2d(x, weight, groups=C) with
    weight[c, 0] = outer(gh, gw); stride 1, VALID padding, no bias."""
    B, C, H, W = x.shape
    kh, kw = int(gh.shape[0]), int(gw.shape[0])
    Ho, Wo = H - kh + 1, W - kw + 1
    assert Ho > 0 and Wo > 0

    # ---- wrapper-side layout plumbing ------------------------------------
    P = B * C                               # fused plane axis (B*C planes)
    Wo_pad = _round_up(Wo, 128)             # lane-dense output width
    Wp = Wo_pad + kw - 1                    # input width incl. kw-1 halo
    xp = x.reshape(P, H, W)
    if Wp != W:
        # Zero-pad the width so every horizontal tap window stays in bounds
        # and every output store is a full 128-lane vst.  Columns >= Wo of the
        # kernel output touch only this padding and are sliced off below.
        xp = jnp.pad(xp, ((0, 0), (0, 0), (0, Wp - W)))
    # TODO(synk): when W is already a multiple of 128, pltpu.roll inside the
    # kernel would avoid this wrapper-side pad copy entirely.

    tp = _planes_per_step(P, H * Wp + Ho * Wo_pad)

    def kernel(gh_ref, gw_ref, x_ref, o_ref):
        # One hoisted load of the plane block; everything below is in-register
        # f32 work on the VPU (taps are SMEM scalars, broadcast for free).
        plane = x_ref[...].astype(jnp.float32)            # (tp, H, Wp)

        # Horizontal 1-D pass: kw lane-shifted windows (static slices).
        hsum = plane[:, :, 0:Wo_pad] * gw_ref[0]
        for j in range(1, kw):
            hsum = hsum + plane[:, :, j:j + Wo_pad] * gw_ref[j]

        # Vertical 1-D pass: kh sublane-shifted windows (static slices).
        acc = hsum[:, 0:Ho, :] * gh_ref[0]
        for i in range(1, kh):
            acc = acc + hsum[:, i:i + Ho, :] * gh_ref[i]

        o_ref[...] = acc.astype(o_ref.dtype)

    out = pl.pallas_call(
        kernel,
        out_shape=jax.ShapeDtypeStruct((P, Ho, Wo_pad), x.dtype),
        grid=(P // tp,),
        in_specs=[
            # Tiny grid-invariant 1-D taps live whole in SMEM (no per-step DMA).
            pl.BlockSpec(memory_space=pltpu.MemorySpace.SMEM),          # gh (kh,)
            pl.BlockSpec(memory_space=pltpu.MemorySpace.SMEM),          # gw (kw,)
            # `tp` fused (H, Wp) planes per grid step, resident in VMEM.
            pl.BlockSpec((tp, H, Wp), lambda g: (g, 0, 0)),
        ],
        out_specs=pl.BlockSpec((tp, Ho, Wo_pad), lambda g: (g, 0, 0)),
        compiler_params=pltpu.CompilerParams(
            dimension_semantics=("parallel",)),
    )(gh, gw, xp)

    # Drop the lane padding and restore (B, C, Ho, Wo).
    return out[:, :, :Wo].reshape(B, C, Ho, Wo)


def _ref_gaussian_smoothing_2d(x, weight):
    """Pure-XLA reference (module-exact depthwise conv) for correctness."""
    C = x.shape[1]
    return jax.lax.conv_general_dilated(
        x, weight, window_strides=(1, 1), padding="VALID",
        dimension_numbers=("NCHW", "OIHW", "NCHW"),
        feature_group_count=C)


if __name__ == "__main__":
    B, C, H, W = 2, 4, 16, 16
    kernel_size, sigma = 5, 1.5

    key = jax.random.PRNGKey(0)
    x = jax.random.normal(key, (B, C, H, W), jnp.float32)

    gh, gw = gaussian_taps_1d(kernel_size, sigma)
    out = jax.block_until_ready(gaussian_smoothing_2d(x, gh, gw))   # Pallas path
    assert out.shape == (B, C, H - kernel_size + 1, W - kernel_size + 1), out.shape

    weight = gaussian_weight_2d(C, kernel_size, sigma)              # module-exact
    ref = jax.block_until_ready(_ref_gaussian_smoothing_2d(x, weight))
    max_err = float(jnp.max(jnp.abs(out - ref)))
    assert jnp.allclose(out, ref, rtol=1e-5, atol=1e-5), max_err

    print("KERNEL_OK")
</pallas_src>

<mosaic_0001>
module attributes {stable_mosaic.version = 11 : i64} {
  func.func @kernel(%arg0: i32, %arg1: memref<5xf32, #tpu.memory_space<smem>>, %arg2: memref<5xf32, #tpu.memory_space<smem>>, %arg3: memref<4x16x132xf32, #tpu.memory_space<vmem>>, %arg4: memref<4x12x128xf32, #tpu.memory_space<vmem>>) attributes {dimension_semantics = [#tpu.dimension_semantics<parallel>], iteration_bounds = array<i64: 2>, scalar_prefetch = 0 : i64, scratch_operands = 0 : i64, tpu.core_type = #tpu.core_type<tc>, window_params = [{transform_indices = @transform_0, window_bounds = array<i64: 5>}, {transform_indices = @transform_1, window_bounds = array<i64: 5>}, {transform_indices = @transform_2, window_bounds = array<i64: 4, 16, 132>}, {transform_indices = @transform_3, window_bounds = array<i64: 4, 12, 128>}]} {
    %c0 = arith.constant 0 : index
    %c0_0 = arith.constant 0 : index
    %c0_1 = arith.constant 0 : index
    %0 = vector.load %arg3[%c0, %c0_0, %c0_1] : memref<4x16x132xf32, #tpu.memory_space<vmem>>, vector<4x16x132xf32>
    %1 = vector.extract_strided_slice %0 {offsets = [0, 0, 0], sizes = [4, 16, 128], strides = [1, 1, 1]} : vector<4x16x132xf32> to vector<4x16x128xf32>
    %c0_2 = arith.constant 0 : index
    %2 = memref.load %arg2[%c0_2] : memref<5xf32, #tpu.memory_space<smem>>
    %3 = vector.broadcast %2 : f32 to vector<4x16x128xf32>
    %4 = arith.mulf %1, %3 : vector<4x16x128xf32>
    %5 = vector.extract_strided_slice %0 {offsets = [0, 0, 1], sizes = [4, 16, 128], strides = [1, 1, 1]} : vector<4x16x132xf32> to vector<4x16x128xf32>
    %c1 = arith.constant 1 : index
    %6 = memref.load %arg2[%c1] : memref<5xf32, #tpu.memory_space<smem>>
    %7 = vector.broadcast %6 : f32 to vector<4x16x128xf32>
    %8 = arith.mulf %5, %7 : vector<4x16x128xf32>
    %9 = arith.addf %4, %8 : vector<4x16x128xf32>
    %10 = vector.extract_strided_slice %0 {offsets = [0, 0, 2], sizes = [4, 16, 128], strides = [1, 1, 1]} : vector<4x16x132xf32> to vector<4x16x128xf32>
    %c2 = arith.constant 2 : index
    %11 = memref.load %arg2[%c2] : memref<5xf32, #tpu.memory_space<smem>>
    %12 = vector.broadcast %11 : f32 to vector<4x16x128xf32>
    %13 = arith.mulf %10, %12 : vector<4x16x128xf32>
    %14 = arith.addf %9, %13 : vector<4x16x128xf32>
    %15 = vector.extract_strided_slice %0 {offsets = [0, 0, 3], sizes = [4, 16, 128], strides = [1, 1, 1]} : vector<4x16x132xf32> to vector<4x16x128xf32>
    %c3 = arith.constant 3 : index
    %16 = memref.load %arg2[%c3] : memref<5xf32, #tpu.memory_space<smem>>
    %17 = vector.broadcast %16 : f32 to vector<4x16x128xf32>
    %18 = arith.mulf %15, %17 : vector<4x16x128xf32>
    %19 = arith.addf %14, %18 : vector<4x16x128xf32>
    %20 = vector.extract_strided_slice %0 {offsets = [0, 0, 4], sizes = [4, 16, 128], strides = [1, 1, 1]} : vector<4x16x132xf32> to vector<4x16x128xf32>
    %c4 = arith.constant 4 : index
    %21 = memref.load %arg2[%c4] : memref<5xf32, #tpu.memory_space<smem>>
    %22 = vector.broadcast %21 : f32 to vector<4x16x128xf32>
    %23 = arith.mulf %20, %22 : vector<4x16x128xf32>
    %24 = arith.addf %19, %23 : vector<4x16x128xf32>
    %25 = vector.extract_strided_slice %24 {offsets = [0, 0, 0], sizes = [4, 12, 128], strides = [1, 1, 1]} : vector<4x16x128xf32> to vector<4x12x128xf32>
    %c0_3 = arith.constant 0 : index
    %26 = memref.load %arg1[%c0_3] : memref<5xf32, #tpu.memory_space<smem>>
    %27 = vector.broadcast %26 : f32 to vector<4x12x128xf32>
    %28 = arith.mulf %25, %27 : vector<4x12x128xf32>
    %29 = vector.extract_strided_slice %24 {offsets = [0, 1, 0], sizes = [4, 12, 128], strides = [1, 1, 1]} : vector<4x16x128xf32> to vector<4x12x128xf32>
    %c1_4 = arith.constant 1 : index
    %30 = memref.load %arg1[%c1_4] : memref<5xf32, #tpu.memory_space<smem>>
    %31 = vector.broadcast %30 : f32 to vector<4x12x128xf32>
    %32 = arith.mulf %29, %31 : vector<4x12x128xf32>
    %33 = arith.addf %28, %32 : vector<4x12x128xf32>
    %34 = vector.extract_strided_slice %24 {offsets = [0, 2, 0], sizes = [4, 12, 128], strides = [1, 1, 1]} : vector<4x16x128xf32> to vector<4x12x128xf32>
    %c2_5 = arith.constant 2 : index
    %35 = memref.load %arg1[%c2_5] : memref<5xf32, #tpu.memory_space<smem>>
    %36 = vector.broadcast %35 : f32 to vector<4x12x128xf32>
    %37 = arith.mulf %34, %36 : vector<4x12x128xf32>
    %38 = arith.addf %33, %37 : vector<4x12x128xf32>
    %39 = vector.extract_strided_slice %24 {offsets = [0, 3, 0], sizes = [4, 12, 128], strides = [1, 1, 1]} : vector<4x16x128xf32> to vector<4x12x128xf32>
    %c3_6 = arith.constant 3 : index
    %40 = memref.load %arg1[%c3_6] : memref<5xf32, #tpu.memory_space<smem>>
    %41 = vector.broadcast %40 : f32 to vector<4x12x128xf32>
    %42 = arith.mulf %39, %41 : vector<4x12x128xf32>
    %43 = arith.addf %38, %42 : vector<4x12x128xf32>
    %44 = vector.extract_strided_slice %24 {offsets = [0, 4, 0], sizes = [4, 12, 128], strides = [1, 1, 1]} : vector<4x16x128xf32> to vector<4x12x128xf32>
    %c4_7 = arith.constant 4 : index
    %45 = memref.load %arg1[%c4_7] : memref<5xf32, #tpu.memory_space<smem>>
    %46 = vector.broadcast %45 : f32 to vector<4x12x128xf32>
    %47 = arith.mulf %44, %46 : vector<4x12x128xf32>
    %48 = arith.addf %43, %47 : vector<4x12x128xf32>
    %c0_8 = arith.constant 0 : index
    %c0_9 = arith.constant 0 : index
    %c0_10 = arith.constant 0 : index
    %49 = vector.load %arg4[%c0_8, %c0_9, %c0_10] : memref<4x12x128xf32, #tpu.memory_space<vmem>>, vector<4x12x128xf32>
    tpu.vector_store %arg4[%c0_8, %c0_9, %c0_10], %48 {strides = array<i32>} : memref<4x12x128xf32, #tpu.memory_space<vmem>>, vector<4x12x128xf32>,
    return
  }
  func.func @transform_0(%arg0: i32) -> i32 {
    %c0_i32 = arith.constant 0 : i32
    %c0_i32_0 = arith.constant 0 : i32
    return %c0_i32 : i32
  }
  func.func @transform_1(%arg0: i32) -> i32 {
    %c0_i32 = arith.constant 0 : i32
    %c0_i32_0 = arith.constant 0 : i32
    return %c0_i32 : i32
  }
  func.func @transform_2(%arg0: i32) -> (i32, i32, i32) {
    %c0_i32 = arith.constant 0 : i32
    %c0_i32_0 = arith.constant 0 : i32
    %c0_i32_1 = arith.constant 0 : i32
    return %arg0, %c0_i32, %c0_i32_0 : i32, i32, i32
  }
  func.func @transform_3(%arg0: i32) -> (i32, i32, i32) {
    %c0_i32 = arith.constant 0 : i32
    %c0_i32_0 = arith.constant 0 : i32
    %c0_i32_1 = arith.constant 0 : i32
    return %arg0, %c0_i32, %c0_i32_0 : i32, i32, i32
  }
}

</mosaic_0001>

<llo_original>
// kernel: tpu_custom_call.1
$region0: #{tpu_custom_call.1}
  #allocation0 [shape = 'u32[]', space=smem, size = 0x4, offset = 0x4, fixed_abs, tag = 'smem constant byte address 0x4 - core index']
  #allocation1 [shape = 'u32[144,128]{1,0:T(1,128)}', space=vmem, size = 0x12000, scoped, tag = 'internal scratch']
  %s0 = inlined_call_operand.hbm [shape: f32[5], index: 0, kind: input, shape index: {}]
  %s1 = inlined_call_operand.vmem [shape: f32[5], index: 1, kind: input, shape index: {}]
  %s2 = inlined_call_operand.hbm [shape: f32[8,16,132], index: 2, kind: input, shape index: {}]
  %s3 = inlined_call_operand.vmem [shape: f32[8,12,128], index: 3, kind: output, shape index: {}]
  %s4 = sld [smem:[#allocation0]]
  $region57: #{tpu_custom_call.1} parent=0
    _
  %s6 = ssub.s32 1, %s4
  %s7 = scalar_select 0, %s6, %s4
  $region1: #{tpu_custom_call.1} parent=0
    #allocation2 [shape = 'u8[512]{0}', space=smem, size = 0x200, scoped, tag = 'input window, operand 0, single buffered']
    #allocation3 [shape = 's32[2]{0}', space=sflag, size = 0x8, scoped, tag = 'scoped memory for tpu_custom_call.1']
    #allocation4 [shape = 's32[2]{0}', space=sflag, size = 0x8, scoped, tag = 'scoped memory for tpu_custom_call.1']
    #allocation5 [shape = 's32[2]{0}', space=sflag, size = 0x8, scoped, tag = 'scoped memory for tpu_custom_call.1']
    #allocation6 [shape = 'u8[512]{0}', space=smem, size = 0x200, scoped, tag = 'input window, operand 1, single buffered']
    #allocation7 [shape = 'u8[131072]{0}', space=vmem, size = 0x20000, scoped, tag = 'input window, operand 2']
    %8 = vsyncpa [#allocation4], 0
    %9 = vsyncpa [#allocation5], 0
    %10 = vsyncpa [#allocation3], 0
    %s11 = scalar_lea.sflag [#allocation3], 1
    %12 = vsyncpa %s11, 0
    loop: start=0, step=1, limit=4
    $region2: #{tpu_custom_call.1} parent=1 // loop_pre_header
      _
    $region3: #{tpu_custom_call.1} parent=1 // loop_header
      %s14 = sphi 0, %s18
      %p15 = scmp.ge.s32.totalorder %s14, 4
      %s22 = sphi 0, %s22
      %s24 = sphi 0, %s22
      %s25 = sphi 0, %s24
      %s39 = sphi 0, %s25
      %s43 = sphi 0, %s43
      %s45 = sphi 0, %s43
      %s46 = sphi 0, %s45
      %s60 = sphi 0, %s46
      %s66 = sphi 0, %s68
      %s69 = sphi 0, %s66
      %s70 = sphi 0, %s69
      %s86 = sphi 0, %s70
      %s92 = sphi 0, %s94
      %s95 = sphi 0, %s92
      %s96 = sphi 0, %s95
      %s112 = sphi 0, %s96
    $region4: #{tpu_custom_call.1} parent=1 // loop_header_branch
      %17 = sbr.rel (%p15) target = $region8
    $region5: #{tpu_custom_call.1} parent=1 // loop_body
      %s19 = ssub.s32 %s14, 1
      %s20 = ssub.s32 %s14, 2
      %s21 = sadd.s32 %s14, 1
      %s23 = sadd.s32 %s22, 1
      %p26 = scmp.eq.s32.totalorder %s14, 1
      %p27 = scmp.ne.s32.totalorder %s22, %s24
      %p28 = scmp.eq.s32.totalorder %s14, 0
      %p29 = por %p27, %p28
      %p30 = scmp.ne.s32.totalorder %s22, %s24
      %p31 = scmp.eq.s32.totalorder %s19, 1
      %p32 = por %p30, %p31
      %p33 = scmp.ne.s32.totalorder %s24, %s25
      %p34 = scmp.eq.s32.totalorder %s19, 0
      %p35 = por %p33, %p34
      %p36 = scmp.ne.s32.totalorder %s24, %s25
      %p37 = scmp.eq.s32.totalorder %s20, 1
      %p38 = por %p36, %p37
      %p40 = scmp.ne.s32.totalorder %s25, %s39
      %p41 = scmp.eq.s32.totalorder %s20, 0
      %p42 = por %p40, %p41
      %s44 = sadd.s32 %s43, 1
      %p47 = scmp.eq.s32.totalorder %s14, 1
      %p48 = scmp.ne.s32.totalorder %s43, %s45
      %p49 = scmp.eq.s32.totalorder %s14, 0
      %p50 = por %p48, %p49
      %p51 = scmp.ne.s32.totalorder %s43, %s45
      %p52 = scmp.eq.s32.totalorder %s19, 1
      %p53 = por %p51, %p52
      %p54 = scmp.ne.s32.totalorder %s45, %s46
      %p55 = scmp.eq.s32.totalorder %s19, 0
      %p56 = por %p54, %p55
      %p57 = scmp.ne.s32.totalorder %s45, %s46
      %p58 = scmp.eq.s32.totalorder %s20, 1
      %p59 = por %p57, %p58
      %p61 = scmp.ne.s32.totalorder %s46, %s60
      %p62 = scmp.eq.s32.totalorder %s20, 0
      %p63 = por %p61, %p62
      %s64 = ssub.s32 %s14, %s21
      %p65 = scmp.eq.s32.totalorder %s64, 0
      %s67 = sadd.s32 %s66, 1
      %s68 = scalar_select %p65, %s66, %s67
      %p71 = pneg %p65
      %p72 = scmp.eq.s32.totalorder %s14, 1
      %p73 = por %p71, %p72
      %p74 = scmp.ne.s32.totalorder %s66, %s69
      %p75 = scmp.eq.s32.totalorder %s14, 0
      %p76 = por %p74, %p75
      %p77 = scmp.ne.s32.totalorder %s66, %s69
      %p78 = scmp.eq.s32.totalorder %s19, 1
      %p79 = por %p77, %p78
      %p80 = scmp.ne.s32.totalorder %s69, %s70
      %p81 = scmp.eq.s32.totalorder %s19, 0
      %p82 = por %p80, %p81
      %p83 = scmp.ne.s32.totalorder %s69, %s70
      %p84 = scmp.eq.s32.totalorder %s20, 1
      %p85 = por %p83, %p84
      %p87 = scmp.ne.s32.totalorder %s70, %s86
      %p88 = scmp.eq.s32.totalorder %s20, 0
      %p89 = por %p87, %p88
      %s90 = ssub.s32 %s14, %s21
      %p91 = scmp.eq.s32.totalorder %s90, 0
      %s93 = sadd.s32 %s92, 1
      %s94 = scalar_select %p91, %s92, %s93
      %p97 = pneg %p91
      %p98 = scmp.eq.s32.totalorder %s14, 1
      %p99 = por %p97, %p98
      %p100 = scmp.ne.s32.totalorder %s92, %s95
      %p101 = scmp.eq.s32.totalorder %s14, 0
      %p102 = por %p100, %p101
      %p103 = scmp.ne.s32.totalorder %s92, %s95
      %p104 = scmp.eq.s32.totalorder %s19, 1
      %p105 = por %p103, %p104
      %p106 = scmp.ne.s32.totalorder %s95, %s96
      %p107 = scmp.eq.s32.totalorder %s19, 0
      %p108 = por %p106, %p107
      %p109 = scmp.ne.s32.totalorder %s95, %s96
      %p110 = scmp.eq.s32.totalorder %s20, 1
      %p111 = por %p109, %p110
      %p113 = scmp.ne.s32.totalorder %s96, %s112
      %p114 = scmp.eq.s32.totalorder %s20, 0
      %p115 = por %p113, %p114
      %p116 = scmp.le.s32.totalorder 1, %s14
      %p117 = scmp.lt.s32.totalorder %s14, 3
      %p118 = pnand %p116, %p117
      %p119 = pneg %p118
      // Predicated region
      $region9: #{tpu_custom_call.1} parent=5 // pred_check
        _
      $region10: #{tpu_custom_call.1} parent=5 // pred_check_branch
        %121 = sbr.rel (%p118) target = $region12
      $region11: #{tpu_custom_call.1} parent=5 // pred_region
        %s122 = ssub.s32 %s14, 1
        // Predicated region
        $region13: #{tpu_custom_call.1} parent=11 // pred_check
          %p123 = pneg %p35
        $region14: #{tpu_custom_call.1} parent=11 // pred_check_branch
          %125 = sbr.rel (%p123) target = $region16
        $region15: #{tpu_custom_call.1} parent=11 // pred_region
          %s127 = ssub.s32 16, 16
          %128 = vsyncadd [#allocation4], %s127
          %131 = dma.hbm_to_smem %s0, 16, [#allocation2], [#allocation4]
        $region16: #{tpu_custom_call.1} parent=11 // pred_fallthru
          _
        // Predicated region
        $region17: #{tpu_custom_call.1} parent=11 // pred_check
          %p132 = pneg %p56
        $region18: #{tpu_custom_call.1} parent=11 // pred_check_branch
          %134 = sbr.rel (%p132) target = $region20
        $region19: #{tpu_custom_call.1} parent=11 // pred_region
          %s136 = ssub.s32 16, 16
          %137 = vsyncadd [#allocation5], %s136
          %s139 = sshll.u32 %s1, 4
          %s140 = int_to_ptr.vmem [resolvable:$true] %s139
          %142 = dma.vmem_to_smem %s140, 16, [#allocation6], [#allocation5]
        $region20: #{tpu_custom_call.1} parent=11 // pred_fallthru
          _
      $region12: #{tpu_custom_call.1} parent=5 // pred_fallthru
        _
      %p143 = scmp.lt.s32.totalorder %s14, 2
      // Predicated region
      $region21: #{tpu_custom_call.1} parent=5 // pred_check
        %p144 = pneg %p143
      $region22: #{tpu_custom_call.1} parent=5 // pred_check_branch
        %146 = sbr.rel (%p144) target = $region24
      $region23: #{tpu_custom_call.1} parent=5 // pred_region
        // Predicated region
        $region25: #{tpu_custom_call.1} parent=23 // pred_check
          %p147 = pneg %p76
        $region26: #{tpu_custom_call.1} parent=23 // pred_check_branch
          %149 = sbr.rel (%p147) target = $region28
        $region27: #{tpu_custom_call.1} parent=23 // pred_region
          %s150 = sand.u32 %s66, 1
          %s151 = scalar_lea.sflag [#allocation3], %s150
          %s152 = sand.u32 %s66, 1
          %s153 = smul.addr %s152, 128
          %s154 = scalar_lea.vmem [#allocation7], %s153
          %s155 = smul.u32 4, %s14
          %s157 = ssub.s32 2048, 2048
          %158 = vsyncadd %s151, %s157
          %s159 = smul.addr %s155, 4
          %s160 = smul.addr %s159, 128
          %s161 = scalar_lea.hbm %s2, %s160
          %s162 = sshll.u32 %s154, 4
          %s163 = int_to_ptr.vmem [resolvable:$true] %s162
          %168 = dma.hbm_to_vmem [thread:$0]  %s161, 2048, %s163, %s151, 256, 256, 16
        $region28: #{tpu_custom_call.1} parent=23 // pred_fallthru
          _
      $region24: #{tpu_custom_call.1} parent=5 // pred_fallthru
        _
      %p169 = scmp.le.s32.totalorder 1, %s14
      %p170 = scmp.lt.s32.totalorder %s14, 3
      %p171 = pnand %p169, %p170
      %p172 = pneg %p171
      // Predicated region
      $region29: #{tpu_custom_call.1} parent=5 // pred_check
        _
      $region30: #{tpu_custom_call.1} parent=5 // pred_check_branch
        %174 = sbr.rel (%p171) target = $region32
      $region31: #{tpu_custom_call.1} parent=5 // pred_region
        %s175 = ssub.s32 %s14, 1
        // Predicated region
        $region33: #{tpu_custom_call.1} parent=31 // pred_check
          %p176 = pneg %p35
        $region34: #{tpu_custom_call.1} parent=31 // pred_check_branch
          %178 = sbr.rel (%p176) target = $region36
        $region35: #{tpu_custom_call.1} parent=31 // pred_region
          %179 = dma.done [#allocation4], 16
        $region36: #{tpu_custom_call.1} parent=31 // pred_fallthru
          _
        // Predicated region
        $region37: #{tpu_custom_call.1} parent=31 // pred_check
          %p180 = pneg %p56
        $region38: #{tpu_custom_call.1} parent=31 // pred_check_branch
          %182 = sbr.rel (%p180) target = $region40
        $region39: #{tpu_custom_call.1} parent=31 // pred_region
          %183 = dma.done [#allocation5], 16
        $region40: #{tpu_custom_call.1} parent=31 // pred_fallthru
          _
        %s184 = sand.u32 %s69, 1
        %s185 = scalar_lea.sflag [#allocation3], %s184
        %s186 = sand.u32 %s69, 1
        %s187 = smul.addr %s186, 128
        %s188 = scalar_lea.vmem [#allocation7], %s187
        // Predicated region
        $region41: #{tpu_custom_call.1} parent=31 // pred_check
          %p189 = pneg %p82
        $region42: #{tpu_custom_call.1} parent=31 // pred_check_branch
          %191 = sbr.rel (%p189) target = $region44
        $region43: #{tpu_custom_call.1} parent=31 // pred_region
          %192 = dma.done %s185, 2048
        $region44: #{tpu_custom_call.1} parent=31 // pred_fallthru
          _
        %193 = sfence
        %p194 = pneg %p35
        %p195 = pneg %p32
        %p196 = pneg %p56
        %p197 = pneg %p53
        %s198 = sand.u32 %s69, 1
        %s199 = scalar_lea.sflag [#allocation3], %s198
        %s200 = sand.u32 %s69, 1
        %s201 = smul.addr %s200, 128
        %s202 = scalar_lea.vmem [#allocation7], %s201
        %p203 = pneg %p82
        %p204 = pneg %p79
        %p205 = pneg %p108
        %p206 = pneg %p105
        %s207 = smul.u32 4, %s19
        %p208 = scmp.lt.s32.totalorder %s207, 7
        %s209 = scalar_select %p208, %s207, 7
        %s210 = smul.addr %s209, 2
        %s211 = smul.addr %s210, 8
        %s212 = scalar_lea.vmem %s3, %s211
        %s213 = smul.u32 4, %s19
        %s214 = smul.u32 4, %s19
        %p215 = scmp.lt.s32.totalorder %s214, 7
        %s216 = scalar_select %p215, %s214, 7
        %s217 = smul.addr %s216, 2
        %s218 = smul.addr %s217, 8
        %s219 = scalar_lea.vmem %s3, %s218
        %s220 = smul.u32 4, %s19
        %v221 = vld [vmem:[%s188] sm:$0xff]
        %v222 = vld [vmem:[%s188 + $0x8] sm:$0xff]
        %v223 = vld [vmem:[%s188 + $0x10] sm:$0xff]
        %v224 = vld [vmem:[%s188 + $0x18] sm:$0xff]
        %v225 = vld [vmem:[%s188 + $0x20] sm:$0xff]
        %v226 = vld [vmem:[%s188 + $0x28] sm:$0xff]
        %v227 = vld [vmem:[%s188 + $0x30] sm:$0xff]
        %v228 = vld [vmem:[%s188 + $0x38] sm:$0xff]
        %v229 = vld [vmem:[%s188 + $0x40] sm:$0xff]
        %v230 = vld [vmem:[%s188 + $0x48] sm:$0xff]
        %v231 = vld [vmem:[%s188 + $0x50] sm:$0xff]
        %v232 = vld [vmem:[%s188 + $0x58] sm:$0xff]
        %v233 = vld [vmem:[%s188 + $0x60] sm:$0xff]
        %v234 = vld [vmem:[%s188 + $0x68] sm:$0xff]
        %v235 = vld [vmem:[%s188 + $0x70] sm:$0xff]
        %v236 = vld [vmem:[%s188 + $0x78] sm:$0xff]
        %s237 = sld [smem:[#allocation6]]
        %v238 = vstv %s237
        %v239 = vmul.f32 %v221, %v238
        %v240 = vmul.f32 %v223, %v238
        %v241 = vmul.f32 %v225, %v238
        %v242 = vmul.f32 %v227, %v238
        %v243 = vmul.f32 %v229, %v238
        %v244 = vmul.f32 %v231, %v238
        %v245 = vmul.f32 %v233, %v238
        %v246 = vmul.f32 %v235, %v238
        %s247 = sld [smem:[#allocation6 + $0x1]]
        %v248 = vstv %s247
        %v249 = vmul.f32 %v221, %v248
        %v250 = vmul.f32 %v222, %v248
        %v251 = vmul.f32 %v223, %v248
        %v252 = vmul.f32 %v224, %v248
        %v253 = vmul.f32 %v225, %v248
        %v254 = vmul.f32 %v226, %v248
        %v255 = vmul.f32 %v227, %v248
        %v256 = vmul.f32 %v228, %v248
        %v257 = vmul.f32 %v229, %v248
        %v258 = vmul.f32 %v230, %v248
        %v259 = vmul.f32 %v231, %v248
        %v260 = vmul.f32 %v232, %v248
        %v261 = vmul.f32 %v233, %v248
        %v262 = vmul.f32 %v234, %v248
        %v263 = vmul.f32 %v235, %v248
        %v264 = vmul.f32 %v236, %v248
        %281 = vrot.lane.b32.xlu0 %v249, 127
        %v282 = vpop.permute.xlu0 %281
        %283 = vrot.lane.b32.xlu0 %v250, 127
        %v284 = vpop.permute.xlu0 %283
        %285 = vrot.lane.b32.xlu0 %v251, 127
        %v286 = vpop.permute.xlu0 %285
        %287 = vrot.lane.b32.xlu0 %v252, 127
        %v288 = vpop.permute.xlu0 %287
        %289 = vrot.lane.b32.xlu0 %v253, 127
        %v290 = vpop.permute.xlu0 %289
        %291 = vrot.lane.b32.xlu0 %v254, 127
        %v292 = vpop.permute.xlu0 %291
        %293 = vrot.lane.b32.xlu0 %v255, 127
        %v294 = vpop.permute.xlu0 %293
        %295 = vrot.lane.b32.xlu0 %v256, 127
        %v296 = vpop.permute.xlu0 %295
        %297 = vrot.lane.b32.xlu0 %v257, 127
        %v298 = vpop.permute.xlu0 %297
        %299 = vrot.lane.b32.xlu0 %v258, 127
        %v300 = vpop.permute.xlu0 %299
        %301 = vrot.lane.b32.xlu0 %v259, 127
        %v302 = vpop.permute.xlu0 %301
        %303 = vrot.lane.b32.xlu0 %v260, 127
        %v304 = vpop.permute.xlu0 %303
        %305 = vrot.lane.b32.xlu0 %v261, 127
        %v306 = vpop.permute.xlu0 %305
        %307 = vrot.lane.b32.xlu0 %v262, 127
        %v308 = vpop.permute.xlu0 %307
        %309 = vrot.lane.b32.xlu0 %v263, 127
        %v310 = vpop.permute.xlu0 %309
        %311 = vrot.lane.b32.xlu0 %v264, 127
        %v312 = vpop.permute.xlu0 %311
        %vm313 = vcmask 1039360
        %v314 = vsel %vm313, %v282, %v284
        %v315 = vsel %vm313, %v286, %v288
        %v316 = vsel %vm313, %v290, %v292
        %v317 = vsel %vm313, %v294, %v296
        %v318 = vsel %vm313, %v298, %v300
        %v319 = vsel %vm313, %v302, %v304
        %v320 = vsel %vm313, %v306, %v308
        %v321 = vsel %vm313, %v310, %v312
        %v330 = vadd.f32 %v239, %v314
        %v331 = vadd.f32 %v240, %v315
        %v332 = vadd.f32 %v241, %v316
        %v333 = vadd.f32 %v242, %v317
        %v334 = vadd.f32 %v243, %v318
        %v335 = vadd.f32 %v244, %v319
        %v336 = vadd.f32 %v245, %v320
        %v337 = vadd.f32 %v246, %v321
        %s338 = sld [smem:[#allocation6 + $0x2]]
        %v339 = vstv %s338
        %v340 = vmul.f32 %v221, %v339
        %v341 = vmul.f32 %v222, %v339
        %v342 = vmul.f32 %v223, %v339
        %v343 = vmul.f32 %v224, %v339
        %v344 = vmul.f32 %v225, %v339
        %v345 = vmul.f32 %v226, %v339
        %v346 = vmul.f32 %v227, %v339
        %v347 = vmul.f32 %v228, %v339
        %v348 = vmul.f32 %v229, %v339
        %v349 = vmul.f32 %v230, %v339
        %v350 = vmul.f32 %v231, %v339
        %v351 = vmul.f32 %v232, %v339
        %v352 = vmul.f32 %v233, %v339
        %v353 = vmul.f32 %v234, %v339
        %v354 = vmul.f32 %v235, %v339
        %v355 = vmul.f32 %v236, %v339
        %372 = vrot.lane.b32.xlu0 %v340, 126
        %v373 = vpop.permute.xlu0 %372
        %374 = vrot.lane.b32.xlu0 %v341, 126
        %v375 = vpop.permute.xlu0 %374
        %376 = vrot.lane.b32.xlu0 %v342, 126
        %v377 = vpop.permute.xlu0 %376
        %378 = vrot.lane.b32.xlu0 %v343, 126
        %v379 = vpop.permute.xlu0 %378
        %380 = vrot.lane.b32.xlu0 %v344, 126
        %v381 = vpop.permute.xlu0 %380
        %382 = vrot.lane.b32.xlu0 %v345, 126
        %v383 = vpop.permute.xlu0 %382
        %384 = vrot.lane.b32.xlu0 %v346, 126
        %v385 = vpop.permute.xlu0 %384
        %386 = vrot.lane.b32.xlu0 %v347, 126
        %v387 = vpop.permute.xlu0 %386
        %388 = vrot.lane.b32.xlu0 %v348, 126
        %v389 = vpop.permute.xlu0 %388
        %390 = vrot.lane.b32.xlu0 %v349, 126
        %v391 = vpop.permute.xlu0 %390
        %392 = vrot.lane.b32.xlu0 %v350, 126
        %v393 = vpop.permute.xlu0 %392
        %394 = vrot.lane.b32.xlu0 %v351, 126
        %v395 = vpop.permute.xlu0 %394
        %396 = vrot.lane.b32.xlu0 %v352, 126
        %v397 = vpop.permute.xlu0 %396
        %398 = vrot.lane.b32.xlu0 %v353, 126
        %v399 = vpop.permute.xlu0 %398
        %400 = vrot.lane.b32.xlu0 %v354, 126
        %v401 = vpop.permute.xlu0 %400
        %402 = vrot.lane.b32.xlu0 %v355, 126
        %v403 = vpop.permute.xlu0 %402
        %vm404 = vcmask 1031168
        %v405 = vsel %vm404, %v373, %v375
        %v406 = vsel %vm404, %v377, %v379
        %v407 = vsel %vm404, %v381, %v383
        %v408 = vsel %vm404, %v385, %v387
        %v409 = vsel %vm404, %v389, %v391
        %v410 = vsel %vm404, %v393, %v395
        %v411 = vsel %vm404, %v397, %v399
        %v412 = vsel %vm404, %v401, %v403
        %v421 = vadd.f32 %v330, %v405
        %v422 = vadd.f32 %v331, %v406
        %v423 = vadd.f32 %v332, %v407
        %v424 = vadd.f32 %v333, %v408
        %v425 = vadd.f32 %v334, %v409
        %v426 = vadd.f32 %v335, %v410
        %v427 = vadd.f32 %v336, %v411
        %v428 = vadd.f32 %v337, %v412
        %s429 = sld [smem:[#allocation6 + $0x3]]
        %v430 = vstv %s429
        %v431 = vmul.f32 %v221, %v430
        %v432 = vmul.f32 %v222, %v430
        %v433 = vmul.f32 %v223, %v430
        %v434 = vmul.f32 %v224, %v430
        %v435 = vmul.f32 %v225, %v430
        %v436 = vmul.f32 %v226, %v430
        %v437 = vmul.f32 %v227, %v430
        %v438 = vmul.f32 %v228, %v430
        %v439 = vmul.f32 %v229, %v430
        %v440 = vmul.f32 %v230, %v430
        %v441 = vmul.f32 %v231, %v430
        %v442 = vmul.f32 %v232, %v430
        %v443 = vmul.f32 %v233, %v430
        %v444 = vmul.f32 %v234, %v430
        %v445 = vmul.f32 %v235, %v430
        %v446 = vmul.f32 %v236, %v430
        %463 = vrot.lane.b32.xlu0 %v431, 125
        %v464 = vpop.permute.xlu0 %463
        %465 = vrot.lane.b32.xlu0 %v432, 125
        %v466 = vpop.permute.xlu0 %465
        %467 = vrot.lane.b32.xlu0 %v433, 125
        %v468 = vpop.permute.xlu0 %467
        %469 = vrot.lane.b32.xlu0 %v434, 125
        %v470 = vpop.permute.xlu0 %469
        %471 = vrot.lane.b32.xlu0 %v435, 125
        %v472 = vpop.permute.xlu0 %471
        %473 = vrot.lane.b32.xlu0 %v436, 125
        %v474 = vpop.permute.xlu0 %473
        %475 = vrot.lane.b32.xlu0 %v437, 125
        %v476 = vpop.permute.xlu0 %475
        %477 = vrot.lane.b32.xlu0 %v438, 125
        %v478 = vpop.permute.xlu0 %477
        %479 = vrot.lane.b32.xlu0 %v439, 125
        %v480 = vpop.permute.xlu0 %479
        %481 = vrot.lane.b32.xlu0 %v440, 125
        %v482 = vpop.permute.xlu0 %481
        %483 = vrot.lane.b32.xlu0 %v441, 125
        %v484 = vpop.permute.xlu0 %483
        %485 = vrot.lane.b32.xlu0 %v442, 125
        %v486 = vpop.permute.xlu0 %485
        %487 = vrot.lane.b32.xlu0 %v443, 125
        %v488 = vpop.permute.xlu0 %487
        %489 = vrot.lane.b32.xlu0 %v444, 125
        %v490 = vpop.permute.xlu0 %489
        %491 = vrot.lane.b32.xlu0 %v445, 125
        %v492 = vpop.permute.xlu0 %491
        %493 = vrot.lane.b32.xlu0 %v446, 125
        %v494 = vpop.permute.xlu0 %493
        %vm495 = vcmask 1022976
        %v496 = vsel %vm495, %v464, %v466
        %v497 = vsel %vm495, %v468, %v470
        %v498 = vsel %vm495, %v472, %v474
        %v499 = vsel %vm495, %v476, %v478
        %v500 = vsel %vm495, %v480, %v482
        %v501 = vsel %vm495, %v484, %v486
        %v502 = vsel %vm495, %v488, %v490
        %v503 = vsel %vm495, %v492, %v494
        %v512 = vadd.f32 %v421, %v496
        %v513 = vadd.f32 %v422, %v497
        %v514 = vadd.f32 %v423, %v498
        %v515 = vadd.f32 %v424, %v499
        %v516 = vadd.f32 %v425, %v500
        %v517 = vadd.f32 %v426, %v501
        %v518 = vadd.f32 %v427, %v502
        %v519 = vadd.f32 %v428, %v503
        %s520 = sld [smem:[#allocation6 + $0x4]]
        %v521 = vstv %s520
        %v522 = vmul.f32 %v221, %v521
        %v523 = vmul.f32 %v222, %v521
        %v524 = vmul.f32 %v223, %v521
        %v525 = vmul.f32 %v224, %v521
        %v526 = vmul.f32 %v225, %v521
        %v527 = vmul.f32 %v226, %v521
        %v528 = vmul.f32 %v227, %v521
        %v529 = vmul.f32 %v228, %v521
        %v530 = vmul.f32 %v229, %v521
        %v531 = vmul.f32 %v230, %v521
        %v532 = vmul.f32 %v231, %v521
        %v533 = vmul.f32 %v232, %v521
        %v534 = vmul.f32 %v233, %v521
        %v535 = vmul.f32 %v234, %v521
        %v536 = vmul.f32 %v235, %v521
        %v537 = vmul.f32 %v236, %v521
        %554 = vrot.lane.b32.xlu0 %v522, 124
        %v555 = vpop.permute.xlu0 %554
        %556 = vrot.lane.b32.xlu0 %v523, 124
        %v557 = vpop.permute.xlu0 %556
        %558 = vrot.lane.b32.xlu0 %v524, 124
        %v559 = vpop.permute.xlu0 %558
        %560 = vrot.lane.b32.xlu0 %v525, 124
        %v561 = vpop.permute.xlu0 %560
        %562 = vrot.lane.b32.xlu0 %v526, 124
        %v563 = vpop.permute.xlu0 %562
        %564 = vrot.lane.b32.xlu0 %v527, 124
        %v565 = vpop.permute.xlu0 %564
        %566 = vrot.lane.b32.xlu0 %v528, 124
        %v567 = vpop.permute.xlu0 %566
        %568 = vrot.lane.b32.xlu0 %v529, 124
        %v569 = vpop.permute.xlu0 %568
        %570 = vrot.lane.b32.xlu0 %v530, 124
        %v571 = vpop.permute.xlu0 %570
        %572 = vrot.lane.b32.xlu0 %v531, 124
        %v573 = vpop.permute.xlu0 %572
        %574 = vrot.lane.b32.xlu0 %v532, 124
        %v575 = vpop.permute.xlu0 %574
        %576 = vrot.lane.b32.xlu0 %v533, 124
        %v577 = vpop.permute.xlu0 %576
        %578 = vrot.lane.b32.xlu0 %v534, 124
        %v579 = vpop.permute.xlu0 %578
        %580 = vrot.lane.b32.xlu0 %v535, 124
        %v581 = vpop.permute.xlu0 %580
        %582 = vrot.lane.b32.xlu0 %v536, 124
        %v583 = vpop.permute.xlu0 %582
        %584 = vrot.lane.b32.xlu0 %v537, 124
        %v585 = vpop.permute.xlu0 %584
        %vm586 = vcmask 1014784
        %v587 = vsel %vm586, %v555, %v557
        %v588 = vsel %vm586, %v559, %v561
        %v589 = vsel %vm586, %v563, %v565
        %v590 = vsel %vm586, %v567, %v569
        %v591 = vsel %vm586, %v571, %v573
        %v592 = vsel %vm586, %v575, %v577
        %v593 = vsel %vm586, %v579, %v581
        %v594 = vsel %vm586, %v583, %v585
        %v603 = vadd.f32 %v512, %v587
        %v604 = vadd.f32 %v513, %v588
        %v605 = vadd.f32 %v514, %v589
        %v606 = vadd.f32 %v515, %v590
        %v607 = vadd.f32 %v516, %v591
        %v608 = vadd.f32 %v517, %v592
        %v609 = vadd.f32 %v518, %v593
        %v610 = vadd.f32 %v519, %v594
        %s611 = sld [smem:[#allocation2]]
        %v612 = vstv %s611
        %v613 = vmul.f32 %v603, %v612
        %v614 = vmul.f32 %v604, %v612
        %v615 = vmul.f32 %v605, %v612
        %v616 = vmul.f32 %v606, %v612
        %v617 = vmul.f32 %v607, %v612
        %v618 = vmul.f32 %v608, %v612
        %v619 = vmul.f32 %v609, %v612
        %v620 = vmul.f32 %v610, %v612
        %s621 = sld [smem:[#allocation2 + $0x1]]
        %v622 = vstv %s621
        %v623 = vmul.f32 %v603, %v622
        %v624 = vmul.f32 %v604, %v622
        %v625 = vmul.f32 %v605, %v622
        %v626 = vmul.f32 %v606, %v622
        %v627 = vmul.f32 %v607, %v622
        %v628 = vmul.f32 %v608, %v622
        %v629 = vmul.f32 %v609, %v622
        %v630 = vmul.f32 %v610, %v622
        %vm639 = vcmask 1046528
        %v640 = vrot.slane %v623, 1
        %v641 = vrot.slane %v624, 1
        %v642 = vsel %vm639, %v640, %v641
        %v643 = vrot.slane %v625, 1
        %v644 = vrot.slane %v626, 1
        %v645 = vsel %vm639, %v643, %v644
        %v646 = vrot.slane %v627, 1
        %v647 = vrot.slane %v628, 1
        %v648 = vsel %vm639, %v646, %v647
        %v649 = vrot.slane %v629, 1
        %v650 = vrot.slane %v630, 1
        %v651 = vsel %vm639, %v649, %v650
        %v660 = vadd.f32 %v613, %v642
        %v661 = vadd.f32 %v614, %v641
        %v662 = vadd.f32 %v615, %v645
        %v663 = vadd.f32 %v616, %v644
        %v664 = vadd.f32 %v617, %v648
        %v665 = vadd.f32 %v618, %v647
        %v666 = vadd.f32 %v619, %v651
        %v667 = vadd.f32 %v620, %v650
        %s668 = sld [smem:[#allocation2 + $0x2]]
        %v669 = vstv %s668
        %v670 = vmul.f32 %v603, %v669
        %v671 = vmul.f32 %v604, %v669
        %v672 = vmul.f32 %v605, %v669
        %v673 = vmul.f32 %v606, %v669
        %v674 = vmul.f32 %v607, %v669
        %v675 = vmul.f32 %v608, %v669
        %v676 = vmul.f32 %v609, %v669
        %v677 = vmul.f32 %v610, %v669
        %vm686 = vcmask 1045504
        %v687 = vrot.slane %v670, 2
        %v688 = vrot.slane %v671, 2
        %v689 = vsel %vm686, %v687, %v688
        %v690 = vrot.slane %v672, 2
        %v691 = vrot.slane %v673, 2
        %v692 = vsel %vm686, %v690, %v691
        %v693 = vrot.slane %v674, 2
        %v694 = vrot.slane %v675, 2
        %v695 = vsel %vm686, %v693, %v694
        %v696 = vrot.slane %v676, 2
        %v697 = vrot.slane %v677, 2
        %v698 = vsel %vm686, %v696, %v697
        %v707 = vadd.f32 %v660, %v689
        %v708 = vadd.f32 %v661, %v688
        %v709 = vadd.f32 %v662, %v692
        %v710 = vadd.f32 %v663, %v691
        %v711 = vadd.f32 %v664, %v695
        %v712 = vadd.f32 %v665, %v694
        %v713 = vadd.f32 %v666, %v698
        %v714 = vadd.f32 %v667, %v697
        %s715 = sld [smem:[#allocation2 + $0x3]]
        %v716 = vstv %s715
        %v717 = vmul.f32 %v603, %v716
        %v718 = vmul.f32 %v604, %v716
        %v719 = vmul.f32 %v605, %v716
        %v720 = vmul.f32 %v606, %v716
        %v721 = vmul.f32 %v607, %v716
        %v722 = vmul.f32 %v608, %v716
        %v723 = vmul.f32 %v609, %v716
        %v724 = vmul.f32 %v610, %v716
        %vm733 = vcmask 1044480
        %v734 = vrot.slane %v717, 3
        %v735 = vrot.slane %v718, 3
        %v736 = vsel %vm733, %v734, %v735
        %v737 = vrot.slane %v719, 3
        %v738 = vrot.slane %v720, 3
        %v739 = vsel %vm733, %v737, %v738
        %v740 = vrot.slane %v721, 3
        %v741 = vrot.slane %v722, 3
        %v742 = vsel %vm733, %v740, %v741
        %v743 = vrot.slane %v723, 3
        %v744 = vrot.slane %v724, 3
        %v745 = vsel %vm733, %v743, %v744
        %v754 = vadd.f32 %v707, %v736
        %v755 = vadd.f32 %v708, %v735
        %v756 = vadd.f32 %v709, %v739
        %v757 = vadd.f32 %v710, %v738
        %v758 = vadd.f32 %v711, %v742
        %v759 = vadd.f32 %v712, %v741
        %v760 = vadd.f32 %v713, %v745
        %v761 = vadd.f32 %v714, %v744
        %s762 = sld [smem:[#allocation2 + $0x4]]
        %v763 = vstv %s762
        %v764 = vmul.f32 %v603, %v763
        %v765 = vmul.f32 %v604, %v763
        %v766 = vmul.f32 %v605, %v763
        %v767 = vmul.f32 %v606, %v763
        %v768 = vmul.f32 %v607, %v763
        %v769 = vmul.f32 %v608, %v763
        %v770 = vmul.f32 %v609, %v763
        %v771 = vmul.f32 %v610, %v763
        %vm780 = vcmask 1043456
        %v781 = vrot.slane %v764, 4
        %v782 = vrot.slane %v765, 4
        %v783 = vsel %vm780, %v781, %v782
        %v784 = vrot.slane %v766, 4
        %v785 = vrot.slane %v767, 4
        %v786 = vsel %vm780, %v784, %v785
        %v787 = vrot.slane %v768, 4
        %v788 = vrot.slane %v769, 4
        %v789 = vsel %vm780, %v787, %v788
        %v790 = vrot.slane %v770, 4
        %v791 = vrot.slane %v771, 4
        %v792 = vsel %vm780, %v790, %v791
        %v801 = vadd.f32 %v754, %v783
        %v802 = vadd.f32 %v755, %v782
        %v803 = vadd.f32 %v756, %v786
        %v804 = vadd.f32 %v757, %v785
        %v805 = vadd.f32 %v758, %v789
        %v806 = vadd.f32 %v759, %v788
        %v807 = vadd.f32 %v760, %v792
        %v808 = vadd.f32 %v761, %v791
        %809 = vst [vmem:[%s219] sm:$0xff] %v801
        %810 = vst [vmem:[%s219 + $0x8] sm:$0xf] %v802
        %811 = vst [vmem:[%s219 + $0x10] sm:$0xff] %v803
        %812 = vst [vmem:[%s219 + $0x18] sm:$0xf] %v804
        %813 = vst [vmem:[%s219 + $0x20] sm:$0xff] %v805
        %814 = vst [vmem:[%s219 + $0x28] sm:$0xf] %v806
        %815 = vst [vmem:[%s219 + $0x30] sm:$0xff] %v807
        %816 = vst [vmem:[%s219 + $0x38] sm:$0xf] %v808
        %s817 = smul.u32 4, %s19
        %p818 = scmp.lt.s32.totalorder %s817, 7
        %s819 = scalar_select %p818, %s817, 7
        %s820 = smul.addr %s819, 2
        %s821 = smul.addr %s820, 8
        %s822 = scalar_lea.vmem %s3, %s821
        // Predicated region
        $region45: #{tpu_custom_call.1} parent=31 // pred_check
          %p823 = pneg %p105
        $region46: #{tpu_custom_call.1} parent=31 // pred_check_branch
          %825 = sbr.rel (%p823) target = $region48
        $region47: #{tpu_custom_call.1} parent=31 // pred_region
          %s826 = smul.u32 4, %s19
        $region48: #{tpu_custom_call.1} parent=31 // pred_fallthru
          _
      $region32: #{tpu_custom_call.1} parent=5 // pred_fallthru
        _
      %p827 = scmp.le.s32.totalorder 2, %s14
      // Predicated region
      $region49: #{tpu_custom_call.1} parent=5 // pred_check
        %p828 = pneg %p827
      $region50: #{tpu_custom_call.1} parent=5 // pred_check_branch
        %830 = sbr.rel (%p828) target = $region52
      $region51: #{tpu_custom_call.1} parent=5 // pred_region
        %s831 = ssub.s32 %s14, 2
        // Predicated region
        $region53: #{tpu_custom_call.1} parent=51 // pred_check
          %p832 = pneg %p111
        $region54: #{tpu_custom_call.1} parent=51 // pred_check_branch
          %834 = sbr.rel (%p832) target = $region56
        $region55: #{tpu_custom_call.1} parent=51 // pred_region
          %s835 = smul.u32 4, %s20
          %p836 = scmp.lt.s32.totalorder %s835, 7
          %s837 = scalar_select %p836, %s835, 7
          %s838 = smul.addr %s837, 2
          %s839 = smul.addr %s838, 8
          %s840 = scalar_lea.vmem %s3, %s839
        $region56: #{tpu_custom_call.1} parent=51 // pred_fallthru
          _
      $region52: #{tpu_custom_call.1} parent=5 // pred_fallthru
        _
    $region6: #{tpu_custom_call.1} parent=1 // loop_footer
      %s18 = sadd.s32 1, %s14
    $region7: #{tpu_custom_call.1} parent=1 // loop_footer_branch
      %13 = sbr.rel target = $region3
    $region8: #{tpu_custom_call.1} parent=1 // loop_exit
      _
    %841 = vsyncpa [#allocation3], 1
    %s842 = scalar_lea.sflag [#allocation3], 1
    %843 = vsyncpa %s842, 1
    %844 = vsyncpa [#allocation4], 1
    %s845 = scalar_lea.sflag [#allocation4], 1
    %846 = vsyncpa %s845, 1
    %847 = vsyncpa [#allocation5], 1
    %s848 = scalar_lea.sflag [#allocation5], 1
    %849 = vsyncpa %s848, 1

</llo_original>
